<compile_context>
chip_gen: v7x
topology: tpu7x:2x2x1
jax: 0.10.0
libtpu: 0.0.40
codegen_flags: <defaults>
</compile_context>

<pallas_src>
import jax
import jax.numpy as jnp
from jax.experimental import pallas as pl
from jax.experimental.pallas import tpu as pltpu


# ---------------------------------------------------------------------------
# Host-side glue: 1-D bilinear (align_corners=True) interpolation matrix.
# ---------------------------------------------------------------------------
def bilinear_matrix(out_size: int, in_size: int) -> jnp.ndarray:
    """Returns M (out_size, in_size) s.t. y = M @ x is the 1-D bilinear
    (align_corners=True) resample of x."""
    if out_size == 1:
        src = jnp.zeros((1,), dtype=jnp.float32)
    else:
        src = (jnp.arange(out_size, dtype=jnp.float32)
               * (in_size - 1) / (out_size - 1))
    lo = jnp.floor(src).astype(jnp.int32)
    hi = jnp.minimum(lo + 1, in_size - 1)
    frac = src - lo.astype(jnp.float32)
    oh_lo = jax.nn.one_hot(lo, in_size, dtype=jnp.float32)
    oh_hi = jax.nn.one_hot(hi, in_size, dtype=jnp.float32)
    return (1.0 - frac)[:, None] * oh_lo + frac[:, None] * oh_hi


# ---------------------------------------------------------------------------
# Fused Pallas kernel: (channel mix -> bilinear resize) for one image.
#   x_ref    : (1, C_in, H_in*W_in)      activation slab (lane-dense)
#   wmix_ref : (C_out, C_in)             1x1 conv weight
#   rt_ref   : (H_in*W_in, H_out*W_out)  R^T = kron(Wh, Ww)^T (resident)
#   b_ref    : (C_out, 1)                bias column
#   o_ref    : (1, C_out, H_out*W_out)   output slab (lane-dense)
# ---------------------------------------------------------------------------
def _fused_kernel(x_ref, wmix_ref, rt_ref, b_ref, o_ref):
    x = x_ref[0]                                              # (C_in, HW_in)
    mixed = jnp.dot(wmix_ref[...], x,
                    preferred_element_type=jnp.float32)       # (C_out, HW_in)
    out = jnp.dot(mixed, rt_ref[...],
                  preferred_element_type=jnp.float32)         # (C_out, HW_out)
    o_ref[0] = (out + b_ref[...]).astype(o_ref.dtype)


# ---------------------------------------------------------------------------
# WrapperModel forward.
# ---------------------------------------------------------------------------
def wrapper_model_forward(x, size, weight, bias, resize=True):
    """x: (N, C_in, H_in, W_in) f32; weight: (C_out, C_in); bias: (C_out,)."""
    N, C_in, H_in, W_in = x.shape
    C_out = weight.shape[0]

    if resize:
        H_out, W_out = size
        wh = bilinear_matrix(H_out, H_in)                     # (H_out, H_in)
        ww = bilinear_matrix(W_out, W_in)                     # (W_out, W_in)
        # R^T[(h*W_in+w), (ho*W_out+wo)] = wh[ho,h] * ww[wo,w]
        r_t = jnp.einsum('oh,pw->hwop', wh, ww).reshape(
            H_in * W_in, H_out * W_out)
    else:
        H_out, W_out = H_in, W_in
        r_t = jnp.eye(H_in * W_in, dtype=jnp.float32)

    HW_in = H_in * W_in
    HW_out = H_out * W_out

    x3 = x.reshape(N, C_in, HW_in).astype(jnp.float32)        # free reshape
    wmix = weight.astype(jnp.float32)
    b2 = bias.reshape(C_out, 1).astype(jnp.float32)

    out3 = pl.pallas_call(
        _fused_kernel,
        out_shape=jax.ShapeDtypeStruct((N, C_out, HW_out), x.dtype),
        grid_spec=pltpu.PrefetchScalarGridSpec(
            num_scalar_prefetch=0,
            grid=(N,),
            in_specs=[
                pl.BlockSpec((1, C_in, HW_in), lambda n: (n, 0, 0)),
                pl.BlockSpec((C_out, C_in), lambda n: (0, 0)),
                pl.BlockSpec((HW_in, HW_out), lambda n: (0, 0)),
                pl.BlockSpec((C_out, 1), lambda n: (0, 0)),
            ],
            out_specs=pl.BlockSpec((1, C_out, HW_out), lambda n: (n, 0, 0)),
        ),
        compiler_params=pltpu.CompilerParams(
            dimension_semantics=("parallel",)),
    )(x3, wmix, r_t, b2)

    return out3.reshape(N, C_out, H_out, W_out)               # free reshape


# ---------------------------------------------------------------------------
# Pure-JAX reference (resize then 1x1 conv, same math, no Pallas).
# ---------------------------------------------------------------------------
def reference_forward(x, size, weight, bias, resize=True):
    if resize:
        wh = bilinear_matrix(size[0], x.shape[2])
        ww = bilinear_matrix(size[1], x.shape[3])
        x = jnp.einsum('oh,nchw,pw->ncop', wh, x, ww)
    return jnp.einsum('oc,nchw->nohw', weight, x) + bias[None, :, None, None]


if __name__ == "__main__":
    key = jax.random.PRNGKey(0)
    kx, kw, kb = jax.random.split(key, 3)

    N, C_in, H_in, W_in = 2, 4, 16, 16
    C_out = 4
    size = (32, 32)

    x = jax.random.normal(kx, (N, C_in, H_in, W_in), dtype=jnp.float32)
    weight = jax.random.normal(kw, (C_out, C_in), dtype=jnp.float32) * 0.1
    bias = jax.random.normal(kb, (C_out,), dtype=jnp.float32) * 0.1

    out = wrapper_model_forward(x, size, weight, bias, resize=True)
    out = jax.block_until_ready(out)

    ref = jax.block_until_ready(
        reference_forward(x, size, weight, bias, resize=True))

    assert out.shape == (N, C_out, size[0], size[1]), out.shape
    assert jnp.allclose(out, ref, atol=1e-4, rtol=1e-4), "mismatch vs reference"

    print("KERNEL_OK")
</pallas_src>

<mosaic_0001>
module attributes {stable_mosaic.version = 11 : i64} {
  func.func @_fused_kernel(%arg0: i32, %arg1: memref<1x4x256xf32, #tpu.memory_space<vmem>>, %arg2: memref<4x4xf32, #tpu.memory_space<vmem>>, %arg3: memref<256x1024xf32, #tpu.memory_space<vmem>>, %arg4: memref<4x1xf32, #tpu.memory_space<vmem>>, %arg5: memref<1x4x1024xf32, #tpu.memory_space<vmem>>) attributes {dimension_semantics = [#tpu.dimension_semantics<parallel>], iteration_bounds = array<i64: 2>, scalar_prefetch = 0 : i64, scratch_operands = 0 : i64, tpu.core_type = #tpu.core_type<tc>, window_params = [{transform_indices = @transform_0, window_bounds = array<i64: 1, 4, 256>}, {pipeline_mode = #tpu.pipeline_mode<synchronous>, transform_indices = @transform_1, window_bounds = array<i64: 4, 4>}, {pipeline_mode = #tpu.pipeline_mode<synchronous>, transform_indices = @transform_2, window_bounds = array<i64: 256, 1024>}, {pipeline_mode = #tpu.pipeline_mode<synchronous>, transform_indices = @transform_3, window_bounds = array<i64: 4, 1>}, {transform_indices = @transform_4, window_bounds = array<i64: 1, 4, 1024>}]} {
    %c0 = arith.constant 0 : index
    %c0_0 = arith.constant 0 : index
    %c0_1 = arith.constant 0 : index
    %0 = vector.load %arg1[%c0, %c0_0, %c0_1] : memref<1x4x256xf32, #tpu.memory_space<vmem>>, vector<1x4x256xf32>
    %1 = vector.shape_cast %0 : vector<1x4x256xf32> to vector<4x256xf32>
    %c0_2 = arith.constant 0 : index
    %c0_3 = arith.constant 0 : index
    %2 = vector.load %arg2[%c0_2, %c0_3] : memref<4x4xf32, #tpu.memory_space<vmem>>, vector<4x4xf32>
    %cst = arith.constant dense<0.000000e+00> : vector<4x256xf32>
    %3 = tpu.matmul %2, %1, %cst {dimension_numbers = #tpu.dot_dimension_numbers<[1], [0], [0], [1], [0, 0, 1, 1], [], []>} : vector<4x4xf32>, vector<4x256xf32>, vector<4x256xf32> -> vector<4x256xf32>
    %c0_4 = arith.constant 0 : index
    %c0_5 = arith.constant 0 : index
    %4 = vector.load %arg3[%c0_4, %c0_5] : memref<256x1024xf32, #tpu.memory_space<vmem>>, vector<256x1024xf32>
    %cst_6 = arith.constant dense<0.000000e+00> : vector<4x1024xf32>
    %5 = tpu.matmul %3, %4, %cst_6 {dimension_numbers = #tpu.dot_dimension_numbers<[1], [0], [0], [1], [0, 0, 1, 1], [], []>} : vector<4x256xf32>, vector<256x1024xf32>, vector<4x1024xf32> -> vector<4x1024xf32>
    %c0_7 = arith.constant 0 : index
    %c0_8 = arith.constant 0 : index
    %6 = vector.load %arg4[%c0_7, %c0_8] : memref<4x1xf32, #tpu.memory_space<vmem>>, vector<4x1xf32>
    %7 = vector.broadcast %6 : vector<4x1xf32> to vector<4x1024xf32>
    %8 = arith.addf %5, %7 : vector<4x1024xf32>
    %c0_9 = arith.constant 0 : index
    %c0_10 = arith.constant 0 : index
    %c0_11 = arith.constant 0 : index
    %9 = vector.load %arg5[%c0_9, %c0_10, %c0_11] : memref<1x4x1024xf32, #tpu.memory_space<vmem>>, vector<1x4x1024xf32>
    %10 = vector.shape_cast %9 : vector<1x4x1024xf32> to vector<4x1024xf32>
    %11 = vector.shape_cast %8 : vector<4x1024xf32> to vector<1x4x1024xf32>
    tpu.vector_store %arg5[%c0_9, %c0_10, %c0_11], %11 {strides = array<i32>} : memref<1x4x1024xf32, #tpu.memory_space<vmem>>, vector<1x4x1024xf32>,
    return
  }
  func.func @transform_0(%arg0: i32) -> (i32, i32, i32) {
    %c0_i32 = arith.constant 0 : i32
    %c0_i32_0 = arith.constant 0 : i32
    %c0_i32_1 = arith.constant 0 : i32
    return %arg0, %c0_i32, %c0_i32_0 : i32, i32, i32
  }
  func.func @transform_1(%arg0: i32) -> (i32, i32) {
    %c0_i32 = arith.constant 0 : i32
    %c0_i32_0 = arith.constant 0 : i32
    %c0_i32_1 = arith.constant 0 : i32
    return %c0_i32, %c0_i32_0 : i32, i32
  }
  func.func @transform_2(%arg0: i32) -> (i32, i32) {
    %c0_i32 = arith.constant 0 : i32
    %c0_i32_0 = arith.constant 0 : i32
    %c0_i32_1 = arith.constant 0 : i32
    return %c0_i32, %c0_i32_0 : i32, i32
  }
  func.func @transform_3(%arg0: i32) -> (i32, i32) {
    %c0_i32 = arith.constant 0 : i32
    %c0_i32_0 = arith.constant 0 : i32
    %c0_i32_1 = arith.constant 0 : i32
    return %c0_i32, %c0_i32_0 : i32, i32
  }
  func.func @transform_4(%arg0: i32) -> (i32, i32, i32) {
    %c0_i32 = arith.constant 0 : i32
    %c0_i32_0 = arith.constant 0 : i32
    %c0_i32_1 = arith.constant 0 : i32
    return %arg0, %c0_i32, %c0_i32_0 : i32, i32, i32
  }
}

</mosaic_0001>

<llo_original>
// kernel: tpu_custom_call.1
$region0: #{tpu_custom_call.1}
  #allocation0 [shape = 'u32[]', space=smem, size = 0x4, offset = 0x4, fixed_abs, tag = 'smem constant byte address 0x4 - core index']
  #allocation1 [shape = 'u32[144,128]{1,0:T(1,128)}', space=vmem, size = 0x12000, scoped, tag = 'internal scratch']
  %s0 = inlined_call_operand.hbm [shape: f32[2,4,256], index: 0, kind: input, shape index: {}]
  %s1 = inlined_call_operand.vmem [shape: f32[4,4], index: 1, kind: input, shape index: {}]
  %s2 = inlined_call_operand.hbm [shape: f32[256,1024], index: 2, kind: input, shape index: {}]
  %s3 = inlined_call_operand.vmem [shape: f32[4,1], index: 3, kind: input, shape index: {}]
  %s4 = inlined_call_operand.hbm [shape: f32[2,4,1024], index: 4, kind: output, shape index: {}]
  %s5 = sld [smem:[#allocation0]]
  $region57: #{tpu_custom_call.1} parent=0
    _
  %s7 = ssub.s32 1, %s5
  %s8 = scalar_select 0, %s7, %s5
  $region1: #{tpu_custom_call.1} parent=0
    #allocation2 [shape = 'u8[8192]{0}', space=vmem, size = 0x2000, scoped, tag = 'input window, operand 0']
    #allocation3 [shape = 's32[2]{0}', space=sflag, size = 0x8, scoped, tag = 'scoped memory for tpu_custom_call.1']
    #allocation4 [shape = 's32[2]{0}', space=sflag, size = 0x8, scoped, tag = 'scoped memory for tpu_custom_call.1']
    #allocation5 [shape = 'u8[1048576]{0}', space=vmem, size = 0x100000, scoped, tag = 'input window, operand 2, single buffered']
    #allocation6 [shape = 's32[1]{0}', space=sflag, size = 0x4, scoped, tag = 'scoped memory for tpu_custom_call.1']
    #allocation7 [shape = 'u8[32768]{0}', space=vmem, size = 0x8000, scoped, tag = 'output window, operand 0']
    %9 = vsyncpa [#allocation3], 0
    %s10 = scalar_lea.sflag [#allocation3], 1
    %11 = vsyncpa %s10, 0
    %12 = vsyncpa [#allocation6], 0
    %13 = vsyncpa [#allocation4], 0
    %s14 = scalar_lea.sflag [#allocation4], 1
    %15 = vsyncpa %s14, 0
    loop: start=0, step=1, limit=4
    $region2: #{tpu_custom_call.1} parent=1 // loop_pre_header
      _
    $region3: #{tpu_custom_call.1} parent=1 // loop_header
      %s17 = sphi 0, %s21
      %p18 = scmp.ge.s32.totalorder %s17, 4
      %s27 = sphi 0, %s29
      %s30 = sphi 0, %s27
      %s31 = sphi 0, %s30
      %s47 = sphi 0, %s31
      %s51 = sphi 0, %s51
      %s53 = sphi 0, %s51
      %s54 = sphi 0, %s53
      %s68 = sphi 0, %s54
      %s72 = sphi 0, %s72
      %s74 = sphi 0, %s72
      %s75 = sphi 0, %s74
      %s89 = sphi 0, %s75
      %s93 = sphi 0, %s93
      %s95 = sphi 0, %s93
      %s96 = sphi 0, %s95
      %s110 = sphi 0, %s96
      %s116 = sphi 0, %s118
      %s119 = sphi 0, %s116
      %s120 = sphi 0, %s119
      %s136 = sphi 0, %s120
    $region4: #{tpu_custom_call.1} parent=1 // loop_header_branch
      %20 = sbr.rel (%p18) target = $region8
    $region5: #{tpu_custom_call.1} parent=1 // loop_body
      %s22 = ssub.s32 %s17, 1
      %s23 = ssub.s32 %s17, 2
      %s24 = sadd.s32 %s17, 1
      %s25 = ssub.s32 %s17, %s24
      %p26 = scmp.eq.s32.totalorder %s25, 0
      %s28 = sadd.s32 %s27, 1
      %s29 = scalar_select %p26, %s27, %s28
      %p32 = pneg %p26
      %p33 = scmp.eq.s32.totalorder %s17, 1
      %p34 = por %p32, %p33
      %p35 = scmp.ne.s32.totalorder %s27, %s30
      %p36 = scmp.eq.s32.totalorder %s17, 0
      %p37 = por %p35, %p36
      %p38 = scmp.ne.s32.totalorder %s27, %s30
      %p39 = scmp.eq.s32.totalorder %s22, 1
      %p40 = por %p38, %p39
      %p41 = scmp.ne.s32.totalorder %s30, %s31
      %p42 = scmp.eq.s32.totalorder %s22, 0
      %p43 = por %p41, %p42
      %p44 = scmp.ne.s32.totalorder %s30, %s31
      %p45 = scmp.eq.s32.totalorder %s23, 1
      %p46 = por %p44, %p45
      %p48 = scmp.ne.s32.totalorder %s31, %s47
      %p49 = scmp.eq.s32.totalorder %s23, 0
      %p50 = por %p48, %p49
      %s52 = sadd.s32 %s51, 1
      %p55 = scmp.eq.s32.totalorder %s17, 1
      %p56 = scmp.ne.s32.totalorder %s51, %s53
      %p57 = scmp.eq.s32.totalorder %s17, 0
      %p58 = por %p56, %p57
      %p59 = scmp.ne.s32.totalorder %s51, %s53
      %p60 = scmp.eq.s32.totalorder %s22, 1
      %p61 = por %p59, %p60
      %p62 = scmp.ne.s32.totalorder %s53, %s54
      %p63 = scmp.eq.s32.totalorder %s22, 0
      %p64 = por %p62, %p63
      %p65 = scmp.ne.s32.totalorder %s53, %s54
      %p66 = scmp.eq.s32.totalorder %s23, 1
      %p67 = por %p65, %p66
      %p69 = scmp.ne.s32.totalorder %s54, %s68
      %p70 = scmp.eq.s32.totalorder %s23, 0
      %p71 = por %p69, %p70
      %s73 = sadd.s32 %s72, 1
      %p76 = scmp.eq.s32.totalorder %s17, 1
      %p77 = scmp.ne.s32.totalorder %s72, %s74
      %p78 = scmp.eq.s32.totalorder %s17, 0
      %p79 = por %p77, %p78
      %p80 = scmp.ne.s32.totalorder %s72, %s74
      %p81 = scmp.eq.s32.totalorder %s22, 1
      %p82 = por %p80, %p81
      %p83 = scmp.ne.s32.totalorder %s74, %s75
      %p84 = scmp.eq.s32.totalorder %s22, 0
      %p85 = por %p83, %p84
      %p86 = scmp.ne.s32.totalorder %s74, %s75
      %p87 = scmp.eq.s32.totalorder %s23, 1
      %p88 = por %p86, %p87
      %p90 = scmp.ne.s32.totalorder %s75, %s89
      %p91 = scmp.eq.s32.totalorder %s23, 0
      %p92 = por %p90, %p91
      %s94 = sadd.s32 %s93, 1
      %p97 = scmp.eq.s32.totalorder %s17, 1
      %p98 = scmp.ne.s32.totalorder %s93, %s95
      %p99 = scmp.eq.s32.totalorder %s17, 0
      %p100 = por %p98, %p99
      %p101 = scmp.ne.s32.totalorder %s93, %s95
      %p102 = scmp.eq.s32.totalorder %s22, 1
      %p103 = por %p101, %p102
      %p104 = scmp.ne.s32.totalorder %s95, %s96
      %p105 = scmp.eq.s32.totalorder %s22, 0
      %p106 = por %p104, %p105
      %p107 = scmp.ne.s32.totalorder %s95, %s96
      %p108 = scmp.eq.s32.totalorder %s23, 1
      %p109 = por %p107, %p108
      %p111 = scmp.ne.s32.totalorder %s96, %s110
      %p112 = scmp.eq.s32.totalorder %s23, 0
      %p113 = por %p111, %p112
      %s114 = ssub.s32 %s17, %s24
      %p115 = scmp.eq.s32.totalorder %s114, 0
      %s117 = sadd.s32 %s116, 1
      %s118 = scalar_select %p115, %s116, %s117
      %p121 = pneg %p115
      %p122 = scmp.eq.s32.totalorder %s17, 1
      %p123 = por %p121, %p122
      %p124 = scmp.ne.s32.totalorder %s116, %s119
      %p125 = scmp.eq.s32.totalorder %s17, 0
      %p126 = por %p124, %p125
      %p127 = scmp.ne.s32.totalorder %s116, %s119
      %p128 = scmp.eq.s32.totalorder %s22, 1
      %p129 = por %p127, %p128
      %p130 = scmp.ne.s32.totalorder %s119, %s120
      %p131 = scmp.eq.s32.totalorder %s22, 0
      %p132 = por %p130, %p131
      %p133 = scmp.ne.s32.totalorder %s119, %s120
      %p134 = scmp.eq.s32.totalorder %s23, 1
      %p135 = por %p133, %p134
      %p137 = scmp.ne.s32.totalorder %s120, %s136
      %p138 = scmp.eq.s32.totalorder %s23, 0
      %p139 = por %p137, %p138
      %p140 = scmp.le.s32.totalorder 1, %s17
      %p141 = scmp.lt.s32.totalorder %s17, 3
      %p142 = pnand %p140, %p141
      %p143 = pneg %p142
      // Predicated region
      $region9: #{tpu_custom_call.1} parent=5 // pred_check
        _
      $region10: #{tpu_custom_call.1} parent=5 // pred_check_branch
        %145 = sbr.rel (%p142) target = $region12
      $region11: #{tpu_custom_call.1} parent=5 // pred_region
        %s146 = ssub.s32 %s17, 1
        // Predicated region
        $region13: #{tpu_custom_call.1} parent=11 // pred_check
          %p147 = pneg %p64
        $region14: #{tpu_custom_call.1} parent=11 // pred_check_branch
          %149 = sbr.rel (%p147) target = $region16
        $region15: #{tpu_custom_call.1} parent=11 // pred_region
          _
        $region16: #{tpu_custom_call.1} parent=11 // pred_fallthru
          _
        // Predicated region
        $region17: #{tpu_custom_call.1} parent=11 // pred_check
          %p150 = pneg %p85
        $region18: #{tpu_custom_call.1} parent=11 // pred_check_branch
          %152 = sbr.rel (%p150) target = $region20
        $region19: #{tpu_custom_call.1} parent=11 // pred_region
          %s154 = ssub.s32 32768, 32768
          %155 = vsyncadd [#allocation6], %s154
          %s156 = sshll.u32 [#allocation5], 4
          %s157 = int_to_ptr.vmem [resolvable:$true] %s156
          %162 = dma.hbm_to_vmem [thread:$0]  %s2, 32768, %s157, [#allocation6], 1024, 1024, 64
        $region20: #{tpu_custom_call.1} parent=11 // pred_fallthru
          _
        // Predicated region
        $region21: #{tpu_custom_call.1} parent=11 // pred_check
          %p163 = pneg %p106
        $region22: #{tpu_custom_call.1} parent=11 // pred_check_branch
          %165 = sbr.rel (%p163) target = $region24
        $region23: #{tpu_custom_call.1} parent=11 // pred_region
          _
        $region24: #{tpu_custom_call.1} parent=11 // pred_fallthru
          _
      $region12: #{tpu_custom_call.1} parent=5 // pred_fallthru
        _
      %p166 = scmp.lt.s32.totalorder %s17, 2
      // Predicated region
      $region25: #{tpu_custom_call.1} parent=5 // pred_check
        %p167 = pneg %p166
      $region26: #{tpu_custom_call.1} parent=5 // pred_check_branch
        %169 = sbr.rel (%p167) target = $region28
      $region27: #{tpu_custom_call.1} parent=5 // pred_region
        // Predicated region
        $region29: #{tpu_custom_call.1} parent=27 // pred_check
          %p170 = pneg %p37
        $region30: #{tpu_custom_call.1} parent=27 // pred_check_branch
          %172 = sbr.rel (%p170) target = $region32
        $region31: #{tpu_custom_call.1} parent=27 // pred_region
          %s173 = sand.u32 %s27, 1
          %s174 = scalar_lea.sflag [#allocation3], %s173
          %s175 = sand.u32 %s27, 1
          %s176 = smul.addr %s175, 8
          %s177 = scalar_lea.vmem [#allocation2], %s176
          %s179 = ssub.s32 128, 128
          %180 = vsyncadd %s174, %s179
          %s181 = smul.addr %s17, 2
          %s182 = smul.addr %s181, 64
          %s183 = scalar_lea.hbm %s0, %s182
          %s185 = sshll.u32 %s177, 4
          %s186 = int_to_ptr.vmem [resolvable:$true] %s185
          %188 = dma.hbm_to_vmem [thread:$0]  %s183, 128, %s186, %s174
        $region32: #{tpu_custom_call.1} parent=27 // pred_fallthru
          _
      $region28: #{tpu_custom_call.1} parent=5 // pred_fallthru
        _
      %p189 = scmp.le.s32.totalorder 1, %s17
      %p190 = scmp.lt.s32.totalorder %s17, 3
      %p191 = pnand %p189, %p190
      %p192 = pneg %p191
      // Predicated region
      $region33: #{tpu_custom_call.1} parent=5 // pred_check
        _
      $region34: #{tpu_custom_call.1} parent=5 // pred_check_branch
        %194 = sbr.rel (%p191) target = $region36
      $region35: #{tpu_custom_call.1} parent=5 // pred_region
        %s195 = ssub.s32 %s17, 1
        %s196 = sand.u32 %s30, 1
        %s197 = scalar_lea.sflag [#allocation3], %s196
        %s198 = sand.u32 %s30, 1
        %s199 = smul.addr %s198, 8
        %s200 = scalar_lea.vmem [#allocation2], %s199
        // Predicated region
        $region37: #{tpu_custom_call.1} parent=35 // pred_check
          %p201 = pneg %p43
        $region38: #{tpu_custom_call.1} parent=35 // pred_check_branch
          %203 = sbr.rel (%p201) target = $region40
        $region39: #{tpu_custom_call.1} parent=35 // pred_region
          %204 = dma.done %s197, 128
        $region40: #{tpu_custom_call.1} parent=35 // pred_fallthru
          _
        // Predicated region
        $region41: #{tpu_custom_call.1} parent=35 // pred_check
          %p205 = pneg %p85
        $region42: #{tpu_custom_call.1} parent=35 // pred_check_branch
          %207 = sbr.rel (%p205) target = $region44
        $region43: #{tpu_custom_call.1} parent=35 // pred_region
          %208 = dma.done [#allocation6], 32768
        $region44: #{tpu_custom_call.1} parent=35 // pred_fallthru
          _
        %s209 = sand.u32 %s30, 1
        %s210 = scalar_lea.sflag [#allocation3], %s209
        %s211 = sand.u32 %s30, 1
        %s212 = smul.addr %s211, 8
        %s213 = scalar_lea.vmem [#allocation2], %s212
        %p214 = pneg %p43
        %p215 = pneg %p40
        %p216 = pneg %p64
        %p217 = pneg %p61
        %p218 = pneg %p85
        %p219 = pneg %p82
        %p220 = pneg %p106
        %p221 = pneg %p103
        %p222 = pneg %p132
        %p223 = pneg %p129
        %s224 = sand.u32 %s119, 1
        %s225 = scalar_lea.sflag [#allocation4], %s224
        %s226 = sand.u32 %s119, 1
        %s227 = smul.addr %s226, 32
        %s228 = scalar_lea.vmem [#allocation7], %s227
        %v229 = vld [vmem:[%s200] sm:$0xff]
        %v230 = vld [vmem:[%s1] sm:$0xf]
        %v232 = vcombine.high %v229, %v229
        %vm233 = vcmask 31744
        %v235 = vsel %vm233, %v230, 0
        %vm237 = vcmask 1043456
        %v238 = vsel %vm237, %v229, 0
        %v240 = vsel %vm237, %v232, 0
        %242 = vmatprep.subr.mxu0 %v240
        %243 = vmatpush1.msra.mxu0 %v238
        %244 = vmatprep.subr.mxu0 0.0
        %245 = vmatpush1.msra.mxu0 0.0
        %246 = vmatprep.subr.mxu0 0.0
        %247 = vmatpush1.msra.mxu0 0.0
        %248 = vmatprep.subr.mxu0 0.0
        %249 = vmatpush1.msra.mxu0 0.0
        %250 = vmatprep.subr.mxu0 0.0
        %251 = vmatpush1.msra.mxu0 0.0
        %252 = vmatprep.subr.mxu0 0.0
        %253 = vmatpush1.msra.mxu0 0.0
        %254 = vmatprep.subr.mxu0 0.0
        %255 = vmatpush1.msra.mxu0 0.0
        %256 = vmatprep.subr.mxu0 0.0
        %257 = vmatpush1.msra.mxu0 0.0
        %258 = vmatprep.subr.mxu0 0.0
        %259 = vmatpush1.msra.mxu0 0.0
        %260 = vmatprep.subr.mxu0 0.0
        %261 = vmatpush1.msra.mxu0 0.0
        %262 = vmatprep.subr.mxu0 0.0
        %263 = vmatpush1.msra.mxu0 0.0
        %264 = vmatprep.subr.mxu0 0.0
        %265 = vmatpush1.msra.mxu0 0.0
        %266 = vmatprep.subr.mxu0 0.0
        %267 = vmatpush1.msra.mxu0 0.0
        %268 = vmatprep.subr.mxu0 0.0
        %269 = vmatpush1.msra.mxu0 0.0
        %270 = vmatprep.subr.mxu0 0.0
        %271 = vmatpush1.msra.mxu0 0.0
        %272 = vmatprep.subr.mxu0 0.0
        %273 = vmatpush1.msra.mxu0 0.0
        %274 = vmatprep.subr.mxu0 0.0
        %275 = vmatpush1.msra.mxu0 0.0
        %276 = vmatprep.subr.mxu0 0.0
        %277 = vmatpush1.msra.mxu0 0.0
        %278 = vmatprep.subr.mxu0 0.0
        %279 = vmatpush1.msra.mxu0 0.0
        %280 = vmatprep.subr.mxu0 0.0
        %281 = vmatpush1.msra.mxu0 0.0
        %282 = vmatprep.subr.mxu0 0.0
        %283 = vmatpush1.msra.mxu0 0.0
        %284 = vmatprep.subr.mxu0 0.0
        %285 = vmatpush1.msra.mxu0 0.0
        %286 = vmatprep.subr.mxu0 0.0
        %287 = vmatpush1.msra.mxu0 0.0
        %288 = vmatprep.subr.mxu0 0.0
        %289 = vmatpush1.msra.mxu0 0.0
        %290 = vmatprep.subr.mxu0 0.0
        %291 = vmatpush1.msra.mxu0 0.0
        %292 = vmatprep.subr.mxu0 0.0
        %293 = vmatpush1.msra.mxu0 0.0
        %294 = vmatprep.subr.mxu0 0.0
        %295 = vmatpush1.msra.mxu0 0.0
        %296 = vmatprep.subr.mxu0 0.0
        %297 = vmatpush1.msra.mxu0 0.0
        %298 = vmatprep.subr.mxu0 0.0
        %299 = vmatpush1.msra.mxu0 0.0
        %300 = vmatprep.subr.mxu0 0.0
        %301 = vmatpush1.msra.mxu0 0.0
        %302 = vmatprep.subr.mxu0 0.0
        %303 = vmatpush1.msra.mxu0 0.0
        %304 = vmatprep.subr.mxu0 0.0
        %305 = vmatpush1.msra.mxu0 0.0
        %306 = vmatprep.mubr.f32.mxu0 0.0
        %307 = vmatmul.mubr.f32.gmra.mrb[0].mxu0 %v235
        %v308 = vpop.f32.mrb[0].mxu0
        %v309 = vadd.f32 0.0, %v308
        %v310 = vpop.f32.mrb[0].mxu0
        %v311 = vadd.f32 0.0, %v310
        %312 = vdwg.mxu0
        %v313 = vld [vmem:[#allocation5] sm:$0xff]
        %v314 = vld [vmem:[#allocation5 + $0x8] sm:$0xff]
        %v315 = vld [vmem:[#allocation5 + $0x10] sm:$0xff]
        %v316 = vld [vmem:[#allocation5 + $0x18] sm:$0xff]
        %v317 = vld [vmem:[#allocation5 + $0x20] sm:$0xff]
        %v318 = vld [vmem:[#allocation5 + $0x28] sm:$0xff]
        %v319 = vld [vmem:[#allocation5 + $0x30] sm:$0xff]
        %v320 = vld [vmem:[#allocation5 + $0x38] sm:$0xff]
        %v321 = vld [vmem:[#allocation5 + $0x40] sm:$0xff]
        %v322 = vld [vmem:[#allocation5 + $0x48] sm:$0xff]
        %v323 = vld [vmem:[#allocation5 + $0x50] sm:$0xff]
        %v324 = vld [vmem:[#allocation5 + $0x58] sm:$0xff]
        %v325 = vld [vmem:[#allocation5 + $0x60] sm:$0xff]
        %v326 = vld [vmem:[#allocation5 + $0x68] sm:$0xff]
        %v327 = vld [vmem:[#allocation5 + $0x70] sm:$0xff]
        %v328 = vld [vmem:[#allocation5 + $0x78] sm:$0xff]
        %v329 = vld [vmem:[#allocation5 + $0x80] sm:$0xff]
        %v330 = vld [vmem:[#allocation5 + $0x88] sm:$0xff]
        %v331 = vld [vmem:[#allocation5 + $0x90] sm:$0xff]
        %v332 = vld [vmem:[#allocation5 + $0x98] sm:$0xff]
        %v333 = vld [vmem:[#allocation5 + $0xa0] sm:$0xff]
        %v334 = vld [vmem:[#allocation5 + $0xa8] sm:$0xff]
        %v335 = vld [vmem:[#allocation5 + $0xb0] sm:$0xff]
        %v336 = vld [vmem:[#allocation5 + $0xb8] sm:$0xff]
        %v337 = vld [vmem:[#allocation5 + $0xc0] sm:$0xff]
        %v338 = vld [vmem:[#allocation5 + $0xc8] sm:$0xff]
        %v339 = vld [vmem:[#allocation5 + $0xd0] sm:$0xff]
        %v340 = vld [vmem:[#allocation5 + $0xd8] sm:$0xff]
        %v341 = vld [vmem:[#allocation5 + $0xe0] sm:$0xff]
        %v342 = vld [vmem:[#allocation5 + $0xe8] sm:$0xff]
        %v343 = vld [vmem:[#allocation5 + $0xf0] sm:$0xff]
        %v344 = vld [vmem:[#allocation5 + $0xf8] sm:$0xff]
        %v345 = vld [vmem:[#allocation5 + $0x100] sm:$0xff]
        %v346 = vld [vmem:[#allocation5 + $0x108] sm:$0xff]
        %v347 = vld [vmem:[#allocation5 + $0x110] sm:$0xff]
        %v348 = vld [vmem:[#allocation5 + $0x118] sm:$0xff]
        %v349 = vld [vmem:[#allocation5 + $0x120] sm:$0xff]
        %v350 = vld [vmem:[#allocation5 + $0x128] sm:$0xff]
        %v351 = vld [vmem:[#allocation5 + $0x130] sm:$0xff]
        %v352 = vld [vmem:[#allocation5 + $0x138] sm:$0xff]
        %v353 = vld [vmem:[#allocation5 + $0x140] sm:$0xff]
        %v354 = vld [vmem:[#allocation5 + $0x148] sm:$0xff]
        %v355 = vld [vmem:[#allocation5 + $0x150] sm:$0xff]
        %v356 = vld [vmem:[#allocation5 + $0x158] sm:$0xff]
        %v357 = vld [vmem:[#allocation5 + $0x160] sm:$0xff]
        %v358 = vld [vmem:[#allocation5 + $0x168] sm:$0xff]
        %v359 = vld [vmem:[#allocation5 + $0x170] sm:$0xff]
        %v360 = vld [vmem:[#allocation5 + $0x178] sm:$0xff]
        %v361 = vld [vmem:[#allocation5 + $0x180] sm:$0xff]
        %v362 = vld [vmem:[#allocation5 + $0x188] sm:$0xff]
        %v363 = vld [vmem:[#allocation5 + $0x190] sm:$0xff]
        %v364 = vld [vmem:[#allocation5 + $0x198] sm:$0xff]
        %v365 = vld [vmem:[#allocation5 + $0x1a0] sm:$0xff]
        %v366 = vld [vmem:[#allocation5 + $0x1a8] sm:$0xff]
        %v367 = vld [vmem:[#allocation5 + $0x1b0] sm:$0xff]
        %v368 = vld [vmem:[#allocation5 + $0x1b8] sm:$0xff]
        %v369 = vld [vmem:[#allocation5 + $0x1c0] sm:$0xff]
        %v370 = vld [vmem:[#allocation5 + $0x1c8] sm:$0xff]
        %v371 = vld [vmem:[#allocation5 + $0x1d0] sm:$0xff]
        %v372 = vld [vmem:[#allocation5 + $0x1d8] sm:$0xff]
        %v373 = vld [vmem:[#allocation5 + $0x1e0] sm:$0xff]
        %v374 = vld [vmem:[#allocation5 + $0x1e8] sm:$0xff]
        %v375 = vld [vmem:[#allocation5 + $0x1f0] sm:$0xff]
        %v376 = vld [vmem:[#allocation5 + $0x1f8] sm:$0xff]
        %v377 = vld [vmem:[#allocation5 + $0x200] sm:$0xff]
        %v378 = vld [vmem:[#allocation5 + $0x208] sm:$0xff]
        %v379 = vld [vmem:[#allocation5 + $0x210] sm:$0xff]
        %v380 = vld [vmem:[#allocation5 + $0x218] sm:$0xff]
        %v381 = vld [vmem:[#allocation5 + $0x220] sm:$0xff]
        %v382 = vld [vmem:[#allocation5 + $0x228] sm:$0xff]
        %v383 = vld [vmem:[#allocation5 + $0x230] sm:$0xff]
        %v384 = vld [vmem:[#allocation5 + $0x238] sm:$0xff]
        %v385 = vld [vmem:[#allocation5 + $0x240] sm:$0xff]
        %v386 = vld [vmem:[#allocation5 + $0x248] sm:$0xff]
        %v387 = vld [vmem:[#allocation5 + $0x250] sm:$0xff]
        %v388 = vld [vmem:[#allocation5 + $0x258] sm:$0xff]
        %v389 = vld [vmem:[#allocation5 + $0x260] sm:$0xff]
        %v390 = vld [vmem:[#allocation5 + $0x268] sm:$0xff]
        %v391 = vld [vmem:[#allocation5 + $0x270] sm:$0xff]
        %v392 = vld [vmem:[#allocation5 + $0x278] sm:$0xff]
        %v393 = vld [vmem:[#allocation5 + $0x280] sm:$0xff]
        %v394 = vld [vmem:[#allocation5 + $0x288] sm:$0xff]
        %v395 = vld [vmem:[#allocation5 + $0x290] sm:$0xff]
        %v396 = vld [vmem:[#allocation5 + $0x298] sm:$0xff]
        %v397 = vld [vmem:[#allocation5 + $0x2a0] sm:$0xff]
        %v398 = vld [vmem:[#allocation5 + $0x2a8] sm:$0xff]
        %v399 = vld [vmem:[#allocation5 + $0x2b0] sm:$0xff]
        %v400 = vld [vmem:[#allocation5 + $0x2b8] sm:$0xff]
        %v401 = vld [vmem:[#allocation5 + $0x2c0] sm:$0xff]
        %v402 = vld [vmem:[#allocation5 + $0x2c8] sm:$0xff]
        %v403 = vld [vmem:[#allocation5 + $0x2d0] sm:$0xff]
        %v404 = vld [vmem:[#allocation5 + $0x2d8] sm:$0xff]
        %v405 = vld [vmem:[#allocation5 + $0x2e0] sm:$0xff]
        %v406 = vld [vmem:[#allocation5 + $0x2e8] sm:$0xff]
        %v407 = vld [vmem:[#allocation5 + $0x2f0] sm:$0xff]
        %v408 = vld [vmem:[#allocation5 + $0x2f8] sm:$0xff]
        %v409 = vld [vmem:[#allocation5 + $0x300] sm:$0xff]
        %v410 = vld [vmem:[#allocation5 + $0x308] sm:$0xff]
        %v411 = vld [vmem:[#allocation5 + $0x310] sm:$0xff]
        %v412 = vld [vmem:[#allocation5 + $0x318] sm:$0xff]
        %v413 = vld [vmem:[#allocation5 + $0x320] sm:$0xff]
        %v414 = vld [vmem:[#allocation5 + $0x328] sm:$0xff]
        %v415 = vld [vmem:[#allocation5 + $0x330] sm:$0xff]
        %v416 = vld [vmem:[#allocation5 + $0x338] sm:$0xff]
        %v417 = vld [vmem:[#allocation5 + $0x340] sm:$0xff]
        %v418 = vld [vmem:[#allocation5 + $0x348] sm:$0xff]
        %v419 = vld [vmem:[#allocation5 + $0x350] sm:$0xff]
        %v420 = vld [vmem:[#allocation5 + $0x358] sm:$0xff]
        %v421 = vld [vmem:[#allocation5 + $0x360] sm:$0xff]
        %v422 = vld [vmem:[#allocation5 + $0x368] sm:$0xff]
        %v423 = vld [vmem:[#allocation5 + $0x370] sm:$0xff]
        %v424 = vld [vmem:[#allocation5 + $0x378] sm:$0xff]
        %v425 = vld [vmem:[#allocation5 + $0x380] sm:$0xff]
        %v426 = vld [vmem:[#allocation5 + $0x388] sm:$0xff]
        %v427 = vld [vmem:[#allocation5 + $0x390] sm:$0xff]
        %v428 = vld [vmem:[#allocation5 + $0x398] sm:$0xff]
        %v429 = vld [vmem:[#allocation5 + $0x3a0] sm:$0xff]
        %v430 = vld [vmem:[#allocation5 + $0x3a8] sm:$0xff]
        %v431 = vld [vmem:[#allocation5 + $0x3b0] sm:$0xff]
        %v432 = vld [vmem:[#allocation5 + $0x3b8] sm:$0xff]
        %v433 = vld [vmem:[#allocation5 + $0x3c0] sm:$0xff]
        %v434 = vld [vmem:[#allocation5 + $0x3c8] sm:$0xff]
        %v435 = vld [vmem:[#allocation5 + $0x3d0] sm:$0xff]
        %v436 = vld [vmem:[#allocation5 + $0x3d8] sm:$0xff]
        %v437 = vld [vmem:[#allocation5 + $0x3e0] sm:$0xff]
        %v438 = vld [vmem:[#allocation5 + $0x3e8] sm:$0xff]
        %v439 = vld [vmem:[#allocation5 + $0x3f0] sm:$0xff]
        %v440 = vld [vmem:[#allocation5 + $0x3f8] sm:$0xff]
        %v441 = vld [vmem:[#allocation5 + $0x400] sm:$0xff]
        %v442 = vld [vmem:[#allocation5 + $0x408] sm:$0xff]
        %v443 = vld [vmem:[#allocation5 + $0x410] sm:$0xff]
        %v444 = vld [vmem:[#allocation5 + $0x418] sm:$0xff]
        %v445 = vld [vmem:[#allocation5 + $0x420] sm:$0xff]
        %v446 = vld [vmem:[#allocation5 + $0x428] sm:$0xff]
        %v447 = vld [vmem:[#allocation5 + $0x430] sm:$0xff]
        %v448 = vld [vmem:[#allocation5 + $0x438] sm:$0xff]
        %v449 = vld [vmem:[#allocation5 + $0x440] sm:$0xff]
        %v450 = vld [vmem:[#allocation5 + $0x448] sm:$0xff]
        %v451 = vld [vmem:[#allocation5 + $0x450] sm:$0xff]
        %v452 = vld [vmem:[#allocation5 + $0x458] sm:$0xff]
        %v453 = vld [vmem:[#allocation5 + $0x460] sm:$0xff]
        %v454 = vld [vmem:[#allocation5 + $0x468] sm:$0xff]
        %v455 = vld [vmem:[#allocation5 + $0x470] sm:$0xff]
        %v456 = vld [vmem:[#allocation5 + $0x478] sm:$0xff]
        %v457 = vld [vmem:[#allocation5 + $0x480] sm:$0xff]
        %v458 = vld [vmem:[#allocation5 + $0x488] sm:$0xff]
        %v459 = vld [vmem:[#allocation5 + $0x490] sm:$0xff]
        %v460 = vld [vmem:[#allocation5 + $0x498] sm:$0xff]
        %v461 = vld [vmem:[#allocation5 + $0x4a0] sm:$0xff]
        %v462 = vld [vmem:[#allocation5 + $0x4a8] sm:$0xff]
        %v463 = vld [vmem:[#allocation5 + $0x4b0] sm:$0xff]
        %v464 = vld [vmem:[#allocation5 + $0x4b8] sm:$0xff]
        %v465 = vld [vmem:[#allocation5 + $0x4c0] sm:$0xff]
        %v466 = vld [vmem:[#allocation5 + $0x4c8] sm:$0xff]
        %v467 = vld [vmem:[#allocation5 + $0x4d0] sm:$0xff]
        %v468 = vld [vmem:[#allocation5 + $0x4d8] sm:$0xff]
        %v469 = vld [vmem:[#allocation5 + $0x4e0] sm:$0xff]
        %v470 = vld [vmem:[#allocation5 + $0x4e8] sm:$0xff]
        %v471 = vld [vmem:[#allocation5 + $0x4f0] sm:$0xff]
        %v472 = vld [vmem:[#allocation5 + $0x4f8] sm:$0xff]
        %v473 = vld [vmem:[#allocation5 + $0x500] sm:$0xff]
        %v474 = vld [vmem:[#allocation5 + $0x508] sm:$0xff]
        %v475 = vld [vmem:[#allocation5 + $0x510] sm:$0xff]
        %v476 = vld [vmem:[#allocation5 + $0x518] sm:$0xff]
        %v477 = vld [vmem:[#allocation5 + $0x520] sm:$0xff]
        %v478 = vld [vmem:[#allocation5 + $0x528] sm:$0xff]
        %v479 = vld [vmem:[#allocation5 + $0x530] sm:$0xff]
        %v480 = vld [vmem:[#allocation5 + $0x538] sm:$0xff]
        %v481 = vld [vmem:[#allocation5 + $0x540] sm:$0xff]
        %v482 = vld [vmem:[#allocation5 + $0x548] sm:$0xff]
        %v483 = vld [vmem:[#allocation5 + $0x550] sm:$0xff]
        %v484 = vld [vmem:[#allocation5 + $0x558] sm:$0xff]
        %v485 = vld [vmem:[#allocation5 + $0x560] sm:$0xff]
        %v486 = vld [vmem:[#allocation5 + $0x568] sm:$0xff]
        %v487 = vld [vmem:[#allocation5 + $0x570] sm:$0xff]
        %v488 = vld [vmem:[#allocation5 + $0x578] sm:$0xff]
        %v489 = vld [vmem:[#allocation5 + $0x580] sm:$0xff]
        %v490 = vld [vmem:[#allocation5 + $0x588] sm:$0xff]
        %v491 = vld [vmem:[#allocation5 + $0x590] sm:$0xff]
        %v492 = vld [vmem:[#allocation5 + $0x598] sm:$0xff]
        %v493 = vld [vmem:[#allocation5 + $0x5a0] sm:$0xff]
        %v494 = vld [vmem:[#allocation5 + $0x5a8] sm:$0xff]
        %v495 = vld [vmem:[#allocation5 + $0x5b0] sm:$0xff]
        %v496 = vld [vmem:[#allocation5 + $0x5b8] sm:$0xff]
        %v497 = vld [vmem:[#allocation5 + $0x5c0] sm:$0xff]
        %v498 = vld [vmem:[#allocation5 + $0x5c8] sm:$0xff]
        %v499 = vld [vmem:[#allocation5 + $0x5d0] sm:$0xff]
        %v500 = vld [vmem:[#allocation5 + $0x5d8] sm:$0xff]
        %v501 = vld [vmem:[#allocation5 + $0x5e0] sm:$0xff]
        %v502 = vld [vmem:[#allocation5 + $0x5e8] sm:$0xff]
        %v503 = vld [vmem:[#allocation5 + $0x5f0] sm:$0xff]
        %v504 = vld [vmem:[#allocation5 + $0x5f8] sm:$0xff]
        %v505 = vld [vmem:[#allocation5 + $0x600] sm:$0xff]
        %v506 = vld [vmem:[#allocation5 + $0x608] sm:$0xff]
        %v507 = vld [vmem:[#allocation5 + $0x610] sm:$0xff]
        %v508 = vld [vmem:[#allocation5 + $0x618] sm:$0xff]
        %v509 = vld [vmem:[#allocation5 + $0x620] sm:$0xff]
        %v510 = vld [vmem:[#allocation5 + $0x628] sm:$0xff]
        %v511 = vld [vmem:[#allocation5 + $0x630] sm:$0xff]
        %v512 = vld [vmem:[#allocation5 + $0x638] sm:$0xff]
        %v513 = vld [vmem:[#allocation5 + $0x640] sm:$0xff]
        %v514 = vld [vmem:[#allocation5 + $0x648] sm:$0xff]
        %v515 = vld [vmem:[#allocation5 + $0x650] sm:$0xff]
        %v516 = vld [vmem:[#allocation5 + $0x658] sm:$0xff]
        %v517 = vld [vmem:[#allocation5 + $0x660] sm:$0xff]
        %v518 = vld [vmem:[#allocation5 + $0x668] sm:$0xff]
        %v519 = vld [vmem:[#allocation5 + $0x670] sm:$0xff]
        %v520 = vld [vmem:[#allocation5 + $0x678] sm:$0xff]
        %v521 = vld [vmem:[#allocation5 + $0x680] sm:$0xff]
        %v522 = vld [vmem:[#allocation5 + $0x688] sm:$0xff]
        %v523 = vld [vmem:[#allocation5 + $0x690] sm:$0xff]
        %v524 = vld [vmem:[#allocation5 + $0x698] sm:$0xff]
        %v525 = vld [vmem:[#allocation5 + $0x6a0] sm:$0xff]
        %v526 = vld [vmem:[#allocation5 + $0x6a8] sm:$0xff]
        %v527 = vld [vmem:[#allocation5 + $0x6b0] sm:$0xff]
        %v528 = vld [vmem:[#allocation5 + $0x6b8] sm:$0xff]
        %v529 = vld [vmem:[#allocation5 + $0x6c0] sm:$0xff]
        %v530 = vld [vmem:[#allocation5 + $0x6c8] sm:$0xff]
        %v531 = vld [vmem:[#allocation5 + $0x6d0] sm:$0xff]
        %v532 = vld [vmem:[#allocation5 + $0x6d8] sm:$0xff]
        %v533 = vld [vmem:[#allocation5 + $0x6e0] sm:$0xff]
        %v534 = vld [vmem:[#allocation5 + $0x6e8] sm:$0xff]
        %v535 = vld [vmem:[#allocation5 + $0x6f0] sm:$0xff]
        %v536 = vld [vmem:[#allocation5 + $0x6f8] sm:$0xff]
        %v537 = vld [vmem:[#allocation5 + $0x700] sm:$0xff]
        %v538 = vld [vmem:[#allocation5 + $0x708] sm:$0xff]
        %v539 = vld [vmem:[#allocation5 + $0x710] sm:$0xff]
        %v540 = vld [vmem:[#allocation5 + $0x718] sm:$0xff]
        %v541 = vld [vmem:[#allocation5 + $0x720] sm:$0xff]
        %v542 = vld [vmem:[#allocation5 + $0x728] sm:$0xff]
        %v543 = vld [vmem:[#allocation5 + $0x730] sm:$0xff]
        %v544 = vld [vmem:[#allocation5 + $0x738] sm:$0xff]
        %v545 = vld [vmem:[#allocation5 + $0x740] sm:$0xff]
        %v546 = vld [vmem:[#allocation5 + $0x748] sm:$0xff]
        %v547 = vld [vmem:[#allocation5 + $0x750] sm:$0xff]
        %v548 = vld [vmem:[#allocation5 + $0x758] sm:$0xff]
        %v549 = vld [vmem:[#allocation5 + $0x760] sm:$0xff]
        %v550 = vld [vmem:[#allocation5 + $0x768] sm:$0xff]
        %v551 = vld [vmem:[#allocation5 + $0x770] sm:$0xff]
        %v552 = vld [vmem:[#allocation5 + $0x778] sm:$0xff]
        %v553 = vld [vmem:[#allocation5 + $0x780] sm:$0xff]
        %v554 = vld [vmem:[#allocation5 + $0x788] sm:$0xff]
        %v555 = vld [vmem:[#allocation5 + $0x790] sm:$0xff]
        %v556 = vld [vmem:[#allocation5 + $0x798] sm:$0xff]
        %v557 = vld [vmem:[#allocation5 + $0x7a0] sm:$0xff]
        %v558 = vld [vmem:[#allocation5 + $0x7a8] sm:$0xff]
        %v559 = vld [vmem:[#allocation5 + $0x7b0] sm:$0xff]
        %v560 = vld [vmem:[#allocation5 + $0x7b8] sm:$0xff]
        %v561 = vld [vmem:[#allocation5 + $0x7c0] sm:$0xff]
        %v562 = vld [vmem:[#allocation5 + $0x7c8] sm:$0xff]
        %v563 = vld [vmem:[#allocation5 + $0x7d0] sm:$0xff]
        %v564 = vld [vmem:[#allocation5 + $0x7d8] sm:$0xff]
        %v565 = vld [vmem:[#allocation5 + $0x7e0] sm:$0xff]
        %v566 = vld [vmem:[#allocation5 + $0x7e8] sm:$0xff]
        %v567 = vld [vmem:[#allocation5 + $0x7f0] sm:$0xff]
        %v568 = vld [vmem:[#allocation5 + $0x7f8] sm:$0xff]
        %v569 = vld [vmem:[%s3] sm:$0xf]
        %571 = vset.pattern.permute.xlu0 0
        %572 = vperm.xlu0 %571, %v569
        %v573 = vpop.permute.xlu0 %572
        %575 = vmatprep.subr.mxu0 %v314
        %576 = vmatpush1.msra.mxu0 %v313
        %577 = vmatprep.subr.mxu0 %v322
        %578 = vmatpush1.msra.mxu0 %v321
        %579 = vmatprep.subr.mxu0 %v330
        %580 = vmatpush1.msra.mxu0 %v329
        %581 = vmatprep.subr.mxu0 %v338
        %582 = vmatpush1.msra.mxu0 %v337
        %583 = vmatprep.subr.mxu0 %v346
        %584 = vmatpush1.msra.mxu0 %v345
        %585 = vmatprep.subr.mxu0 %v354
        %586 = vmatpush1.msra.mxu0 %v353
        %587 = vmatprep.subr.mxu0 %v362
        %588 = vmatpush1.msra.mxu0 %v361
        %589 = vmatprep.subr.mxu0 %v370
        %590 = vmatpush1.msra.mxu0 %v369
        %591 = vmatprep.subr.mxu0 %v378
        %592 = vmatpush1.msra.mxu0 %v377
        %593 = vmatprep.subr.mxu0 %v386
        %594 = vmatpush1.msra.mxu0 %v385
        %595 = vmatprep.subr.mxu0 %v394
        %596 = vmatpush1.msra.mxu0 %v393
        %597 = vmatprep.subr.mxu0 %v402
        %598 = vmatpush1.msra.mxu0 %v401
        %599 = vmatprep.subr.mxu0 %v410
        %600 = vmatpush1.msra.mxu0 %v409
        %601 = vmatprep.subr.mxu0 %v418
        %602 = vmatpush1.msra.mxu0 %v417
        %603 = vmatprep.subr.mxu0 %v426
        %604 = vmatpush1.msra.mxu0 %v425
        %605 = vmatprep.subr.mxu0 %v434
        %606 = vmatpush1.msra.mxu0 %v433
        %607 = vmatprep.subr.mxu0 %v442
        %608 = vmatpush1.msra.mxu0 %v441
        %609 = vmatprep.subr.mxu0 %v450
        %610 = vmatpush1.msra.mxu0 %v449
        %611 = vmatprep.subr.mxu0 %v458
        %612 = vmatpush1.msra.mxu0 %v457
        %613 = vmatprep.subr.mxu0 %v466
        %614 = vmatpush1.msra.mxu0 %v465
        %615 = vmatprep.subr.mxu0 %v474
        %616 = vmatpush1.msra.mxu0 %v473
        %617 = vmatprep.subr.mxu0 %v482
        %618 = vmatpush1.msra.mxu0 %v481
        %619 = vmatprep.subr.mxu0 %v490
        %620 = vmatpush1.msra.mxu0 %v489
        %621 = vmatprep.subr.mxu0 %v498
        %622 = vmatpush1.msra.mxu0 %v497
        %623 = vmatprep.subr.mxu0 %v506
        %624 = vmatpush1.msra.mxu0 %v505
        %625 = vmatprep.subr.mxu0 %v514
        %626 = vmatpush1.msra.mxu0 %v513
        %627 = vmatprep.subr.mxu0 %v522
        %628 = vmatpush1.msra.mxu0 %v521
        %629 = vmatprep.subr.mxu0 %v530
        %630 = vmatpush1.msra.mxu0 %v529
        %631 = vmatprep.subr.mxu0 %v538
        %632 = vmatpush1.msra.mxu0 %v537
        %633 = vmatprep.subr.mxu0 %v546
        %634 = vmatpush1.msra.mxu0 %v545
        %635 = vmatprep.subr.mxu0 %v554
        %636 = vmatpush1.msra.mxu0 %v553
        %637 = vmatprep.subr.mxu0 %v562
        %638 = vmatpush1.msra.mxu0 %v561
        %639 = vmatprep.mubr.f32.mxu0 %v311
        %640 = vmatmul.mubr.f32.gmra.mrb[0].mxu0 %v309
        %v641 = vpop.f32.mrb[0].mxu0
        %v642 = vadd.f32 %v573, %v641
        %v643 = vpop.f32.mrb[0].mxu0
        %v644 = vadd.f32 %v573, %v643
        %645 = vdwg.mxu0
        %646 = vmatprep.subr.mxu0 %v316
        %647 = vmatpush1.msra.mxu0 %v315
        %648 = vmatprep.subr.mxu0 %v324
        %649 = vmatpush1.msra.mxu0 %v323
        %650 = vmatprep.subr.mxu0 %v332
        %651 = vmatpush1.msra.mxu0 %v331
        %652 = vmatprep.subr.mxu0 %v340
        %653 = vmatpush1.msra.mxu0 %v339
        %654 = vmatprep.subr.mxu0 %v348
        %655 = vmatpush1.msra.mxu0 %v347
        %656 = vmatprep.subr.mxu0 %v356
        %657 = vmatpush1.msra.mxu0 %v355
        %658 = vmatprep.subr.mxu0 %v364
        %659 = vmatpush1.msra.mxu0 %v363
        %660 = vmatprep.subr.mxu0 %v372
        %661 = vmatpush1.msra.mxu0 %v371
        %662 = vmatprep.subr.mxu0 %v380
        %663 = vmatpush1.msra.mxu0 %v379
        %664 = vmatprep.subr.mxu0 %v388
        %665 = vmatpush1.msra.mxu0 %v387
        %666 = vmatprep.subr.mxu0 %v396
        %667 = vmatpush1.msra.mxu0 %v395
        %668 = vmatprep.subr.mxu0 %v404
        %669 = vmatpush1.msra.mxu0 %v403
        %670 = vmatprep.subr.mxu0 %v412
        %671 = vmatpush1.msra.mxu0 %v411
        %672 = vmatprep.subr.mxu0 %v420
        %673 = vmatpush1.msra.mxu0 %v419
        %674 = vmatprep.subr.mxu0 %v428
        %675 = vmatpush1.msra.mxu0 %v427
        %676 = vmatprep.subr.mxu0 %v436
        %677 = vmatpush1.msra.mxu0 %v435
        %678 = vmatprep.subr.mxu0 %v444
        %679 = vmatpush1.msra.mxu0 %v443
        %680 = vmatprep.subr.mxu0 %v452
        %681 = vmatpush1.msra.mxu0 %v451
        %682 = vmatprep.subr.mxu0 %v460
        %683 = vmatpush1.msra.mxu0 %v459
        %684 = vmatprep.subr.mxu0 %v468
        %685 = vmatpush1.msra.mxu0 %v467
        %686 = vmatprep.subr.mxu0 %v476
        %687 = vmatpush1.msra.mxu0 %v475
        %688 = vmatprep.subr.mxu0 %v484
        %689 = vmatpush1.msra.mxu0 %v483
        %690 = vmatprep.subr.mxu0 %v492
        %691 = vmatpush1.msra.mxu0 %v491
        %692 = vmatprep.subr.mxu0 %v500
        %693 = vmatpush1.msra.mxu0 %v499
        %694 = vmatprep.subr.mxu0 %v508
        %695 = vmatpush1.msra.mxu0 %v507
        %696 = vmatprep.subr.mxu0 %v516
        %697 = vmatpush1.msra.mxu0 %v515
        %698 = vmatprep.subr.mxu0 %v524
        %699 = vmatpush1.msra.mxu0 %v523
        %700 = vmatprep.subr.mxu0 %v532
        %701 = vmatpush1.msra.mxu0 %v531
        %702 = vmatprep.subr.mxu0 %v540
        %703 = vmatpush1.msra.mxu0 %v539
        %704 = vmatprep.subr.mxu0 %v548
        %705 = vmatpush1.msra.mxu0 %v547
        %706 = vmatprep.subr.mxu0 %v556
        %707 = vmatpush1.msra.mxu0 %v555
        %708 = vmatprep.subr.mxu0 %v564
        %709 = vmatpush1.msra.mxu0 %v563
        %710 = vmatprep.mubr.f32.mxu0 %v311
        %711 = vmatmul.mubr.f32.gmra.mrb[0].mxu0 %v309
        %v712 = vpop.f32.mrb[0].mxu0
        %v713 = vadd.f32 %v573, %v712
        %v714 = vpop.f32.mrb[0].mxu0
        %v715 = vadd.f32 %v573, %v714
        %716 = vdwg.mxu0
        %717 = vmatprep.subr.mxu0 %v318
        %718 = vmatpush1.msra.mxu0 %v317
        %719 = vmatprep.subr.mxu0 %v326
        %720 = vmatpush1.msra.mxu0 %v325
        %721 = vmatprep.subr.mxu0 %v334
        %722 = vmatpush1.msra.mxu0 %v333
        %723 = vmatprep.subr.mxu0 %v342
        %724 = vmatpush1.msra.mxu0 %v341
        %725 = vmatprep.subr.mxu0 %v350
        %726 = vmatpush1.msra.mxu0 %v349
        %727 = vmatprep.subr.mxu0 %v358
        %728 = vmatpush1.msra.mxu0 %v357
        %729 = vmatprep.subr.mxu0 %v366
        %730 = vmatpush1.msra.mxu0 %v365
        %731 = vmatprep.subr.mxu0 %v374
        %732 = vmatpush1.msra.mxu0 %v373
        %733 = vmatprep.subr.mxu0 %v382
        %734 = vmatpush1.msra.mxu0 %v381
        %735 = vmatprep.subr.mxu0 %v390
        %736 = vmatpush1.msra.mxu0 %v389
        %737 = vmatprep.subr.mxu0 %v398
        %738 = vmatpush1.msra.mxu0 %v397
        %739 = vmatprep.subr.mxu0 %v406
        %740 = vmatpush1.msra.mxu0 %v405
        %741 = vmatprep.subr.mxu0 %v414
        %742 = vmatpush1.msra.mxu0 %v413
        %743 = vmatprep.subr.mxu0 %v422
        %744 = vmatpush1.msra.mxu0 %v421
        %745 = vmatprep.subr.mxu0 %v430
        %746 = vmatpush1.msra.mxu0 %v429
        %747 = vmatprep.subr.mxu0 %v438
        %748 = vmatpush1.msra.mxu0 %v437
        %749 = vmatprep.subr.mxu0 %v446
        %750 = vmatpush1.msra.mxu0 %v445
        %751 = vmatprep.subr.mxu0 %v454
        %752 = vmatpush1.msra.mxu0 %v453
        %753 = vmatprep.subr.mxu0 %v462
        %754 = vmatpush1.msra.mxu0 %v461
        %755 = vmatprep.subr.mxu0 %v470
        %756 = vmatpush1.msra.mxu0 %v469
        %757 = vmatprep.subr.mxu0 %v478
        %758 = vmatpush1.msra.mxu0 %v477
        %759 = vmatprep.subr.mxu0 %v486
        %760 = vmatpush1.msra.mxu0 %v485
        %761 = vmatprep.subr.mxu0 %v494
        %762 = vmatpush1.msra.mxu0 %v493
        %763 = vmatprep.subr.mxu0 %v502
        %764 = vmatpush1.msra.mxu0 %v501
        %765 = vmatprep.subr.mxu0 %v510
        %766 = vmatpush1.msra.mxu0 %v509
        %767 = vmatprep.subr.mxu0 %v518
        %768 = vmatpush1.msra.mxu0 %v517
        %769 = vmatprep.subr.mxu0 %v526
        %770 = vmatpush1.msra.mxu0 %v525
        %771 = vmatprep.subr.mxu0 %v534
        %772 = vmatpush1.msra.mxu0 %v533
        %773 = vmatprep.subr.mxu0 %v542
        %774 = vmatpush1.msra.mxu0 %v541
        %775 = vmatprep.subr.mxu0 %v550
        %776 = vmatpush1.msra.mxu0 %v549
        %777 = vmatprep.subr.mxu0 %v558
        %778 = vmatpush1.msra.mxu0 %v557
        %779 = vmatprep.subr.mxu0 %v566
        %780 = vmatpush1.msra.mxu0 %v565
        %781 = vmatprep.mubr.f32.mxu0 %v311
        %782 = vmatmul.mubr.f32.gmra.mrb[0].mxu0 %v309
        %v783 = vpop.f32.mrb[0].mxu0
        %v784 = vadd.f32 %v573, %v783
        %v785 = vpop.f32.mrb[0].mxu0
        %v786 = vadd.f32 %v573, %v785
        %787 = vdwg.mxu0
        %788 = vmatprep.subr.mxu0 %v320
        %789 = vmatpush1.msra.mxu0 %v319
        %790 = vmatprep.subr.mxu0 %v328
        %791 = vmatpush1.msra.mxu0 %v327
        %792 = vmatprep.subr.mxu0 %v336
        %793 = vmatpush1.msra.mxu0 %v335
        %794 = vmatprep.subr.mxu0 %v344
        %795 = vmatpush1.msra.mxu0 %v343
        %796 = vmatprep.subr.mxu0 %v352
        %797 = vmatpush1.msra.mxu0 %v351
        %798 = vmatprep.subr.mxu0 %v360
        %799 = vmatpush1.msra.mxu0 %v359
        %800 = vmatprep.subr.mxu0 %v368
        %801 = vmatpush1.msra.mxu0 %v367
        %802 = vmatprep.subr.mxu0 %v376
        %803 = vmatpush1.msra.mxu0 %v375
        %804 = vmatprep.subr.mxu0 %v384
        %805 = vmatpush1.msra.mxu0 %v383
        %806 = vmatprep.subr.mxu0 %v392
        %807 = vmatpush1.msra.mxu0 %v391
        %808 = vmatprep.subr.mxu0 %v400
        %809 = vmatpush1.msra.mxu0 %v399
        %810 = vmatprep.subr.mxu0 %v408
        %811 = vmatpush1.msra.mxu0 %v407
        %812 = vmatprep.subr.mxu0 %v416
        %813 = vmatpush1.msra.mxu0 %v415
        %814 = vmatprep.subr.mxu0 %v424
        %815 = vmatpush1.msra.mxu0 %v423
        %816 = vmatprep.subr.mxu0 %v432
        %817 = vmatpush1.msra.mxu0 %v431
        %818 = vmatprep.subr.mxu0 %v440
        %819 = vmatpush1.msra.mxu0 %v439
        %820 = vmatprep.subr.mxu0 %v448
        %821 = vmatpush1.msra.mxu0 %v447
        %822 = vmatprep.subr.mxu0 %v456
        %823 = vmatpush1.msra.mxu0 %v455
        %824 = vmatprep.subr.mxu0 %v464
        %825 = vmatpush1.msra.mxu0 %v463
        %826 = vmatprep.subr.mxu0 %v472
        %827 = vmatpush1.msra.mxu0 %v471
        %828 = vmatprep.subr.mxu0 %v480
        %829 = vmatpush1.msra.mxu0 %v479
        %830 = vmatprep.subr.mxu0 %v488
        %831 = vmatpush1.msra.mxu0 %v487
        %832 = vmatprep.subr.mxu0 %v496
        %833 = vmatpush1.msra.mxu0 %v495
        %834 = vmatprep.subr.mxu0 %v504
        %835 = vmatpush1.msra.mxu0 %v503
        %836 = vmatprep.subr.mxu0 %v512
        %837 = vmatpush1.msra.mxu0 %v511
        %838 = vmatprep.subr.mxu0 %v520
        %839 = vmatpush1.msra.mxu0 %v519
        %840 = vmatprep.subr.mxu0 %v528
        %841 = vmatpush1.msra.mxu0 %v527
        %842 = vmatprep.subr.mxu0 %v536
        %843 = vmatpush1.msra.mxu0 %v535
        %844 = vmatprep.subr.mxu0 %v544
        %845 = vmatpush1.msra.mxu0 %v543
        %846 = vmatprep.subr.mxu0 %v552
        %847 = vmatpush1.msra.mxu0 %v551
        %848 = vmatprep.subr.mxu0 %v560
        %849 = vmatpush1.msra.mxu0 %v559
        %850 = vmatprep.subr.mxu0 %v568
        %851 = vmatpush1.msra.mxu0 %v567
        %852 = vmatprep.mubr.f32.mxu0 %v311
        %853 = vmatmul.mubr.f32.gmra.mrb[0].mxu0 %v309
        %v854 = vpop.f32.mrb[0].mxu0
        %v855 = vadd.f32 %v573, %v854
        %v856 = vpop.f32.mrb[0].mxu0
        %v857 = vadd.f32 %v573, %v856
        %858 = vdwg.mxu0
        %v867 = vcombine.low %v642, %v644
        %v868 = vcombine.low %v713, %v715
        %v869 = vcombine.low %v784, %v786
        %v870 = vcombine.low %v855, %v857
        %875 = vst [vmem:[%s228] sm:$0xff] %v867
        %876 = vst [vmem:[%s228 + $0x8] sm:$0xff] %v868
        %877 = vst [vmem:[%s228 + $0x10] sm:$0xff] %v869
        %878 = vst [vmem:[%s228 + $0x18] sm:$0xff] %v870
        %s879 = sand.u32 %s119, 1
        %s880 = scalar_lea.sflag [#allocation4], %s879
        %s881 = sand.u32 %s119, 1
        %s882 = smul.addr %s881, 32
        %s883 = scalar_lea.vmem [#allocation7], %s882
        // Predicated region
        $region45: #{tpu_custom_call.1} parent=35 // pred_check
          %p884 = pneg %p129
        $region46: #{tpu_custom_call.1} parent=35 // pred_check_branch
          %886 = sbr.rel (%p884) target = $region48
        $region47: #{tpu_custom_call.1} parent=35 // pred_region
          %s888 = ssub.s32 512, 512
          %889 = vsyncadd %s880, %s888
          %s890 = smul.addr %s22, 8
          %s891 = smul.addr %s890, 64
          %s892 = scalar_lea.hbm %s4, %s891
          %s894 = sshll.u32 %s883, 4
          %s895 = int_to_ptr.vmem [resolvable:$true] %s894
          %897 = dma.vmem_to_hbm [thread:$0]  %s895, 512, %s892, %s880
        $region48: #{tpu_custom_call.1} parent=35 // pred_fallthru
          _
      $region36: #{tpu_custom_call.1} parent=5 // pred_fallthru
        _
      %p898 = scmp.le.s32.totalorder 2, %s17
      // Predicated region
      $region49: #{tpu_custom_call.1} parent=5 // pred_check
        %p899 = pneg %p898
      $region50: #{tpu_custom_call.1} parent=5 // pred_check_branch
        %901 = sbr.rel (%p899) target = $region52
      $region51: #{tpu_custom_call.1} parent=5 // pred_region
        %s902 = ssub.s32 %s17, 2
        // Predicated region
        $region53: #{tpu_custom_call.1} parent=51 // pred_check
          %p903 = pneg %p135
        $region54: #{tpu_custom_call.1} parent=51 // pred_check_branch
          %905 = sbr.rel (%p903) target = $region56
        $region55: #{tpu_custom_call.1} parent=51 // pred_region
          %s906 = sand.u32 %s120, 1
          %s907 = scalar_lea.sflag [#allocation4], %s906
          %s908 = sand.u32 %s120, 1
          %s909 = smul.addr %s908, 32
          %s910 = scalar_lea.vmem [#allocation7], %s909
          %911 = dma.done %s907, 512
        $region56: #{tpu_custom_call.1} parent=51 // pred_fallthru
          _
      $region52: #{tpu_custom_call.1} parent=5 // pred_fallthru
        _
    $region6: #{tpu_custom_call.1} parent=1 // loop_footer
      %s21 = sadd.s32 1, %s17
    $region7: #{tpu_custom_call.1} parent=1 // loop_footer_branch
      %16 = sbr.rel target = $region3
    $region8: #{tpu_custom_call.1} parent=1 // loop_exit
      _
    %912 = vsyncpa [#allocation3], 1
    %s913 = scalar_lea.sflag [#allocation3], 1
    %914 = vsyncpa %s913, 1
    %915 = vsyncpa [#allocation6], 1
    %916 = vsyncpa [#allocation4], 1
    %s917 = scalar_lea.sflag [#allocation4], 1
    %918 = vsyncpa %s917, 1

</llo_original>
